<compile_context>
chip_gen: v7x
topology: tpu7x:2x2x1
jax: 0.10.0
libtpu: 0.0.40
codegen_flags: <defaults>
</compile_context>

<pallas_src>
import functools

import jax
import jax.numpy as jnp
from jax.experimental import pallas as pl
from jax.experimental.pallas import tpu as pltpu

HIDDEN_PAD = 128   # fc1 out (28) padded to lane width
OUT_PAD = 128      # fc2 out (10) padded to lane width
NEG_BIG = -1e30    # "minus infinity" for padded logit lanes


def _round_up(n, m):
    return ((n + m - 1) // m) * m


def mnist_mlp_kernel(x_ref, w1_ref, b1_ref, w2_ref, b2_ref, out_ref):
    # x_ref:  (TB, 784)  bf16
    # w1_ref: (784, 128) bf16   (cols >= 28 are zero)
    # b1_ref: (1, 128)   f32    (cols >= 28 are zero)
    # w2_ref: (128, 128) f32    (rows >= 28 and cols >= 10 are zero)
    # b2_ref: (1, 128)   f32    (cols >= 10 hold -1e30 so padded logits vanish)
    # out_ref:(TB, 128)  f32    (cols >= 10 are garbage; sliced off in wrapper)

    # fc1 (bf16 MXU matmul, f32 accumulation) + bias + ReLU in f32
    h = jnp.dot(x_ref[...], w1_ref[...], preferred_element_type=jnp.float32)
    h = jnp.maximum(h + b1_ref[...], 0.0)

    # fc2 (f32)
    logits = jnp.dot(h, w2_ref[...], preferred_element_type=jnp.float32) + b2_ref[...]

    # log_softmax over the padded last dim; padded lanes are ~-1e30 so they
    # contribute exp(.) == 0 to the normalizer and never win the max.
    m = jnp.max(logits, axis=-1, keepdims=True)
    shifted = logits - m
    lse = jnp.log(jnp.sum(jnp.exp(shifted), axis=-1, keepdims=True))
    out_ref[...] = shifted - lse


@functools.partial(jax.jit, static_argnames=())
def mnist_net_forward(x, w1, b1, w2, b2):
    """x: any shape with trailing elements divisible by 784 (e.g. (B,1,28,28)).

    w1: (28, 784), b1: (28,), w2: (10, 28), b2: (10,)  -- PyTorch nn.Linear layout.
    Returns (B, 10) log-probabilities in float32.
    """
    x2d = x.reshape(-1, 28 * 28)
    B = x2d.shape[0]

    # Batch tiling: big tiles to amortize per-grid-step overhead, rounded so the
    # bf16 block respects the (16, 128) sublane/lane tiling.
    TB = min(512, _round_up(B, 16))
    B_pad = _round_up(B, TB)
    num_tiles = B_pad // TB

    # Stream x in bf16 (halves HBM traffic); pad batch up to a TB multiple.
    x_p = jnp.zeros((B_pad, 28 * 28), jnp.bfloat16).at[:B].set(x2d.astype(jnp.bfloat16))

    # Lane-dense (128-padded) weights / biases.
    w1_p = jnp.zeros((28 * 28, HIDDEN_PAD), jnp.bfloat16).at[:, :28].set(
        w1.T.astype(jnp.bfloat16))
    b1_p = jnp.zeros((1, HIDDEN_PAD), jnp.float32).at[:, :28].set(
        b1.reshape(1, -1).astype(jnp.float32))
    w2_p = jnp.zeros((HIDDEN_PAD, OUT_PAD), jnp.float32).at[:28, :10].set(
        w2.T.astype(jnp.float32))
    b2_p = jnp.full((1, OUT_PAD), NEG_BIG, jnp.float32).at[:, :10].set(
        b2.reshape(1, -1).astype(jnp.float32))

    out_full = pl.pallas_call(
        mnist_mlp_kernel,
        out_shape=jax.ShapeDtypeStruct((B_pad, OUT_PAD), jnp.float32),
        grid=(num_tiles,),
        in_specs=[
            pl.BlockSpec((TB, 28 * 28), lambda i: (i, 0)),          # x tile streams
            pl.BlockSpec((28 * 28, HIDDEN_PAD), lambda i: (0, 0)),  # weights stay resident
            pl.BlockSpec((1, HIDDEN_PAD), lambda i: (0, 0)),
            pl.BlockSpec((HIDDEN_PAD, OUT_PAD), lambda i: (0, 0)),
            pl.BlockSpec((1, OUT_PAD), lambda i: (0, 0)),
        ],
        out_specs=pl.BlockSpec((TB, OUT_PAD), lambda i: (i, 0)),
        compiler_params=pltpu.CompilerParams(
            dimension_semantics=("parallel",),
            vmem_limit_bytes=32 << 20,
        ),
    )(x_p, w1_p, b1_p, w2_p, b2_p)

    # Drop batch padding and the 118 padded logit lanes.
    return out_full[:B, :10]


def init_params(key):
    """Deterministic parameter init matching nn.Linear shapes: W is (out, in)."""
    k1, k2, k3, k4 = jax.random.split(key, 4)
    # Scales mimic PyTorch's default uniform(-1/sqrt(fan_in), 1/sqrt(fan_in)).
    s1 = 1.0 / jnp.sqrt(28.0 * 28.0)
    s2 = 1.0 / jnp.sqrt(28.0)
    w1 = jax.random.uniform(k1, (28, 28 * 28), jnp.float32, -s1, s1)
    b1 = jax.random.uniform(k2, (28,), jnp.float32, -s1, s1)
    w2 = jax.random.uniform(k3, (10, 28), jnp.float32, -s2, s2)
    b2 = jax.random.uniform(k4, (10,), jnp.float32, -s2, s2)
    return w1, b1, w2, b2


if __name__ == "__main__":
    key = jax.random.PRNGKey(0)
    kx, kp = jax.random.split(key)

    # Small MNIST-like batch: (B, C, H, W) = (2, 1, 28, 28), NCHW as in PyTorch.
    x = jax.random.normal(kx, (2, 1, 28, 28), jnp.float32)
    w1, b1, w2, b2 = init_params(kp)

    out = mnist_net_forward(x, w1, b1, w2, b2)
    out = jax.block_until_ready(out)
    assert out.shape == (2, 10)

    # Reference with the same bf16 input-streaming path (f32 accumulation).
    x2d = x.reshape(-1, 28 * 28)
    h_ref = jnp.maximum(
        jnp.dot(x2d.astype(jnp.bfloat16), w1.T.astype(jnp.bfloat16),
                preferred_element_type=jnp.float32) + b1, 0.0)
    logits_ref = h_ref @ w2.T + b2
    ref = jax.nn.log_softmax(logits_ref, axis=-1)
    assert jnp.allclose(out, ref, atol=1e-3, rtol=1e-3), (
        jnp.max(jnp.abs(out - ref)))

    # Also sanity-check against the pure-f32 PyTorch-equivalent forward
    # (looser tolerance due to bf16 input streaming).
    h_f32 = jnp.maximum(x2d @ w1.T + b1, 0.0)
    ref_f32 = jax.nn.log_softmax(h_f32 @ w2.T + b2, axis=-1)
    assert jnp.allclose(out, ref_f32, atol=5e-2, rtol=5e-2)

    print("KERNEL_OK")
</pallas_src>

<mosaic_0001>
module attributes {stable_mosaic.version = 11 : i64} {
  func.func @mnist_mlp_kernel(%arg0: i32, %arg1: memref<16x784xbf16, #tpu.memory_space<vmem>>, %arg2: memref<784x128xbf16, #tpu.memory_space<vmem>>, %arg3: memref<1x128xf32, #tpu.memory_space<vmem>>, %arg4: memref<128x128xf32, #tpu.memory_space<vmem>>, %arg5: memref<1x128xf32, #tpu.memory_space<vmem>>, %arg6: memref<16x128xf32, #tpu.memory_space<vmem>>) attributes {dimension_semantics = [#tpu.dimension_semantics<parallel>], iteration_bounds = array<i64: 1>, scalar_prefetch = 0 : i64, scratch_operands = 0 : i64, tpu.core_type = #tpu.core_type<tc>, window_params = [{transform_indices = @transform_0, window_bounds = array<i64: 16, 784>}, {pipeline_mode = #tpu.pipeline_mode<synchronous>, transform_indices = @transform_1, window_bounds = array<i64: 784, 128>}, {pipeline_mode = #tpu.pipeline_mode<synchronous>, transform_indices = @transform_2, window_bounds = array<i64: 1, 128>}, {pipeline_mode = #tpu.pipeline_mode<synchronous>, transform_indices = @transform_3, window_bounds = array<i64: 128, 128>}, {pipeline_mode = #tpu.pipeline_mode<synchronous>, transform_indices = @transform_4, window_bounds = array<i64: 1, 128>}, {transform_indices = @transform_5, window_bounds = array<i64: 16, 128>}]} {
    %c0 = arith.constant 0 : index
    %c0_0 = arith.constant 0 : index
    %0 = vector.load %arg1[%c0, %c0_0] : memref<16x784xbf16, #tpu.memory_space<vmem>>, vector<16x784xbf16>
    %c0_1 = arith.constant 0 : index
    %c0_2 = arith.constant 0 : index
    %1 = vector.load %arg2[%c0_1, %c0_2] : memref<784x128xbf16, #tpu.memory_space<vmem>>, vector<784x128xbf16>
    %cst = arith.constant dense<0.000000e+00> : vector<16x128xf32>
    %2 = tpu.matmul %0, %1, %cst {dimension_numbers = #tpu.dot_dimension_numbers<[1], [0], [0], [1], [0, 0, 1, 1], [], []>} : vector<16x784xbf16>, vector<784x128xbf16>, vector<16x128xf32> -> vector<16x128xf32>
    %c0_3 = arith.constant 0 : index
    %c0_4 = arith.constant 0 : index
    %3 = vector.load %arg3[%c0_3, %c0_4] : memref<1x128xf32, #tpu.memory_space<vmem>>, vector<1x128xf32>
    %4 = vector.broadcast %3 : vector<1x128xf32> to vector<16x128xf32>
    %5 = arith.addf %2, %4 : vector<16x128xf32>
    %cst_5 = arith.constant 0.000000e+00 : f32
    %6 = vector.broadcast %cst_5 : f32 to vector<16x128xf32>
    %7 = arith.maximumf %5, %6 : vector<16x128xf32>
    %c0_6 = arith.constant 0 : index
    %c0_7 = arith.constant 0 : index
    %8 = vector.load %arg4[%c0_6, %c0_7] : memref<128x128xf32, #tpu.memory_space<vmem>>, vector<128x128xf32>
    %cst_8 = arith.constant dense<0.000000e+00> : vector<16x128xf32>
    %9 = tpu.matmul %7, %8, %cst_8 {dimension_numbers = #tpu.dot_dimension_numbers<[1], [0], [0], [1], [0, 0, 1, 1], [], []>} : vector<16x128xf32>, vector<128x128xf32>, vector<16x128xf32> -> vector<16x128xf32>
    %c0_9 = arith.constant 0 : index
    %c0_10 = arith.constant 0 : index
    %10 = vector.load %arg5[%c0_9, %c0_10] : memref<1x128xf32, #tpu.memory_space<vmem>>, vector<1x128xf32>
    %11 = vector.broadcast %10 : vector<1x128xf32> to vector<16x128xf32>
    %12 = arith.addf %9, %11 : vector<16x128xf32>
    %cst_11 = arith.constant dense<0xFF800000> : vector<16xf32>
    %13 = vector.multi_reduction <maximumf>, %12, %cst_11 [1] : vector<16x128xf32> to vector<16xf32>
    %14 = vector.shape_cast %13 : vector<16xf32> to vector<16x1xf32>
    %15 = vector.broadcast %14 : vector<16x1xf32> to vector<16x128xf32>
    %16 = arith.subf %12, %15 : vector<16x128xf32>
    %17 = math.exp %16 : vector<16x128xf32>
    %cst_12 = arith.constant dense<0.000000e+00> : vector<16xf32>
    %18 = vector.multi_reduction <add>, %17, %cst_12 [1] : vector<16x128xf32> to vector<16xf32>
    %19 = vector.shape_cast %18 : vector<16xf32> to vector<16x1xf32>
    %20 = math.log %19 : vector<16x1xf32>
    %21 = vector.broadcast %20 : vector<16x1xf32> to vector<16x128xf32>
    %22 = arith.subf %16, %21 : vector<16x128xf32>
    %c0_13 = arith.constant 0 : index
    %c0_14 = arith.constant 0 : index
    %23 = vector.load %arg6[%c0_13, %c0_14] : memref<16x128xf32, #tpu.memory_space<vmem>>, vector<16x128xf32>
    tpu.vector_store %arg6[%c0_13, %c0_14], %22 {strides = array<i32>} : memref<16x128xf32, #tpu.memory_space<vmem>>, vector<16x128xf32>,
    return
  }
  func.func @transform_0(%arg0: i32) -> (i32, i32) {
    %c0_i32 = arith.constant 0 : i32
    %c0_i32_0 = arith.constant 0 : i32
    return %arg0, %c0_i32 : i32, i32
  }
  func.func @transform_1(%arg0: i32) -> (i32, i32) {
    %c0_i32 = arith.constant 0 : i32
    %c0_i32_0 = arith.constant 0 : i32
    %c0_i32_1 = arith.constant 0 : i32
    return %c0_i32, %c0_i32_0 : i32, i32
  }
  func.func @transform_2(%arg0: i32) -> (i32, i32) {
    %c0_i32 = arith.constant 0 : i32
    %c0_i32_0 = arith.constant 0 : i32
    %c0_i32_1 = arith.constant 0 : i32
    return %c0_i32, %c0_i32_0 : i32, i32
  }
  func.func @transform_3(%arg0: i32) -> (i32, i32) {
    %c0_i32 = arith.constant 0 : i32
    %c0_i32_0 = arith.constant 0 : i32
    %c0_i32_1 = arith.constant 0 : i32
    return %c0_i32, %c0_i32_0 : i32, i32
  }
  func.func @transform_4(%arg0: i32) -> (i32, i32) {
    %c0_i32 = arith.constant 0 : i32
    %c0_i32_0 = arith.constant 0 : i32
    %c0_i32_1 = arith.constant 0 : i32
    return %c0_i32, %c0_i32_0 : i32, i32
  }
  func.func @transform_5(%arg0: i32) -> (i32, i32) {
    %c0_i32 = arith.constant 0 : i32
    %c0_i32_0 = arith.constant 0 : i32
    return %arg0, %c0_i32 : i32, i32
  }
}

</mosaic_0001>

<llo_original>
// kernel: mnist_net_forward.1
$region0: #{mnist_net_forward.1}
  #allocation0 [shape = 'u32[]', space=smem, size = 0x4, offset = 0x4, fixed_abs, tag = 'smem constant byte address 0x4 - core index']
  #allocation1 [shape = 'u32[144,128]{1,0:T(1,128)}', space=vmem, size = 0x12000, scoped, tag = 'internal scratch']
  %s0 = inlined_call_operand.vmem [shape: bf16[16,784], index: 0, kind: input, shape index: {}]
  %s1 = inlined_call_operand.vmem [shape: bf16[784,128], index: 1, kind: input, shape index: {}]
  %s2 = inlined_call_operand.vmem [shape: f32[1,128], index: 2, kind: input, shape index: {}]
  %s3 = inlined_call_operand.vmem [shape: f32[128,128], index: 3, kind: input, shape index: {}]
  %s4 = inlined_call_operand.vmem [shape: f32[1,128], index: 4, kind: input, shape index: {}]
  %s5 = inlined_call_operand.vmem [shape: f32[16,128], index: 5, kind: output, shape index: {}]
  %s6 = sld [smem:[#allocation0]]
  $region30: #{mnist_net_forward.1} parent=0
    _
  %s8 = ssub.s32 1, %s6
  %s9 = scalar_select 0, %s8, %s6
  // Predicated region
  $region2: #{mnist_net_forward.1} parent=0 // pred_check
    _
  $region3: #{mnist_net_forward.1} parent=0 // pred_check_branch
    %11 = sbr.rel (0) target = $region5
  $region4: #{mnist_net_forward.1} parent=0 // pred_region
    _
  $region5: #{mnist_net_forward.1} parent=0 // pred_fallthru
    _
  // Predicated region
  $region6: #{mnist_net_forward.1} parent=0 // pred_check
    _
  $region7: #{mnist_net_forward.1} parent=0 // pred_check_branch
    %13 = sbr.rel (0) target = $region9
  $region8: #{mnist_net_forward.1} parent=0 // pred_region
    _
  $region9: #{mnist_net_forward.1} parent=0 // pred_fallthru
    _
  // Predicated region
  $region10: #{mnist_net_forward.1} parent=0 // pred_check
    _
  $region11: #{mnist_net_forward.1} parent=0 // pred_check_branch
    %15 = sbr.rel (0) target = $region13
  $region12: #{mnist_net_forward.1} parent=0 // pred_region
    _
  $region13: #{mnist_net_forward.1} parent=0 // pred_fallthru
    _
  // Predicated region
  $region14: #{mnist_net_forward.1} parent=0 // pred_check
    _
  $region15: #{mnist_net_forward.1} parent=0 // pred_check_branch
    %17 = sbr.rel (0) target = $region17
  $region16: #{mnist_net_forward.1} parent=0 // pred_region
    _
  $region17: #{mnist_net_forward.1} parent=0 // pred_fallthru
    _
  // Predicated region
  $region18: #{mnist_net_forward.1} parent=0 // pred_check
    _
  $region19: #{mnist_net_forward.1} parent=0 // pred_check_branch
    %19 = sbr.rel (0) target = $region21
  $region20: #{mnist_net_forward.1} parent=0 // pred_region
    _
  $region21: #{mnist_net_forward.1} parent=0 // pred_fallthru
    _
  %v21 = vld [vmem:[%s0] sm:$0xff]
  %v22 = vld [vmem:[%s0 + $0x8] sm:$0xff]
  %v23 = vld [vmem:[%s0 + $0x10] sm:$0xff]
  %v24 = vld [vmem:[%s0 + $0x18] sm:$0xf]
  %v25 = vld [vmem:[%s0 + $0x1c] sm:$0xff]
  %v26 = vld [vmem:[%s0 + $0x24] sm:$0xff]
  %v27 = vld [vmem:[%s0 + $0x2c] sm:$0xff]
  %v28 = vld [vmem:[%s0 + $0x34] sm:$0xf]
  %v29 = vld [vmem:[%s1] sm:$0xf]
  %v30 = vld [vmem:[%s1 + $0x4] sm:$0xf]
  %v31 = vld [vmem:[%s1 + $0x8] sm:$0xf]
  %v32 = vld [vmem:[%s1 + $0xc] sm:$0xf]
  %v33 = vld [vmem:[%s1 + $0x10] sm:$0xf]
  %v34 = vld [vmem:[%s1 + $0x14] sm:$0xf]
  %v35 = vld [vmem:[%s1 + $0x18] sm:$0xf]
  %v36 = vld [vmem:[%s1 + $0x1c] sm:$0xf]
  %v37 = vld [vmem:[%s1 + $0x20] sm:$0xf]
  %v38 = vld [vmem:[%s1 + $0x24] sm:$0xf]
  %v39 = vld [vmem:[%s1 + $0x28] sm:$0xf]
  %v40 = vld [vmem:[%s1 + $0x2c] sm:$0xf]
  %v41 = vld [vmem:[%s1 + $0x30] sm:$0xf]
  %v42 = vld [vmem:[%s1 + $0x34] sm:$0xf]
  %v43 = vld [vmem:[%s1 + $0x38] sm:$0xf]
  %v44 = vld [vmem:[%s1 + $0x3c] sm:$0xf]
  %v45 = vld [vmem:[%s1 + $0x40] sm:$0xf]
  %v46 = vld [vmem:[%s1 + $0x44] sm:$0xf]
  %v47 = vld [vmem:[%s1 + $0x48] sm:$0xf]
  %v48 = vld [vmem:[%s1 + $0x4c] sm:$0xf]
  %v49 = vld [vmem:[%s1 + $0x50] sm:$0xf]
  %v50 = vld [vmem:[%s1 + $0x54] sm:$0xf]
  %v51 = vld [vmem:[%s1 + $0x58] sm:$0xf]
  %v52 = vld [vmem:[%s1 + $0x5c] sm:$0xf]
  %v53 = vld [vmem:[%s1 + $0x60] sm:$0xf]
  %v54 = vld [vmem:[%s1 + $0x64] sm:$0xf]
  %v55 = vld [vmem:[%s1 + $0x68] sm:$0xf]
  %v56 = vld [vmem:[%s1 + $0x6c] sm:$0xf]
  %v57 = vld [vmem:[%s1 + $0x70] sm:$0xf]
  %v58 = vld [vmem:[%s1 + $0x74] sm:$0xf]
  %v59 = vld [vmem:[%s1 + $0x78] sm:$0xf]
  %v60 = vld [vmem:[%s1 + $0x7c] sm:$0xf]
  %v61 = vld [vmem:[%s1 + $0x80] sm:$0xf]
  %v62 = vld [vmem:[%s1 + $0x84] sm:$0xf]
  %v63 = vld [vmem:[%s1 + $0x88] sm:$0xf]
  %v64 = vld [vmem:[%s1 + $0x8c] sm:$0xf]
  %v65 = vld [vmem:[%s1 + $0x90] sm:$0xf]
  %v66 = vld [vmem:[%s1 + $0x94] sm:$0xf]
  %v67 = vld [vmem:[%s1 + $0x98] sm:$0xf]
  %v68 = vld [vmem:[%s1 + $0x9c] sm:$0xf]
  %v69 = vld [vmem:[%s1 + $0xa0] sm:$0xf]
  %v70 = vld [vmem:[%s1 + $0xa4] sm:$0xf]
  %v71 = vld [vmem:[%s1 + $0xa8] sm:$0xf]
  %v72 = vld [vmem:[%s1 + $0xac] sm:$0xf]
  %v73 = vld [vmem:[%s1 + $0xb0] sm:$0xf]
  %v74 = vld [vmem:[%s1 + $0xb4] sm:$0xf]
  %v75 = vld [vmem:[%s1 + $0xb8] sm:$0xf]
  %v76 = vld [vmem:[%s1 + $0xbc] sm:$0xf]
  %v77 = vld [vmem:[%s1 + $0xc0] sm:$0xf]
  %v78 = vld [vmem:[%s1 + $0xc4] sm:$0xf]
  %v79 = vld [vmem:[%s1 + $0xc8] sm:$0xf]
  %v80 = vld [vmem:[%s1 + $0xcc] sm:$0xf]
  %v81 = vld [vmem:[%s1 + $0xd0] sm:$0xf]
  %v82 = vld [vmem:[%s1 + $0xd4] sm:$0xf]
  %v83 = vld [vmem:[%s1 + $0xd8] sm:$0xf]
  %v84 = vld [vmem:[%s1 + $0xdc] sm:$0xf]
  %v85 = vld [vmem:[%s1 + $0xe0] sm:$0xf]
  %v86 = vld [vmem:[%s1 + $0xe4] sm:$0xf]
  %v87 = vld [vmem:[%s1 + $0xe8] sm:$0xf]
  %v88 = vld [vmem:[%s1 + $0xec] sm:$0xf]
  %v89 = vld [vmem:[%s1 + $0xf0] sm:$0xf]
  %v90 = vld [vmem:[%s1 + $0xf4] sm:$0xf]
  %v91 = vld [vmem:[%s1 + $0xf8] sm:$0xf]
  %v92 = vld [vmem:[%s1 + $0xfc] sm:$0xf]
  %v93 = vld [vmem:[%s1 + $0x100] sm:$0xf]
  %v94 = vld [vmem:[%s1 + $0x104] sm:$0xf]
  %v95 = vld [vmem:[%s1 + $0x108] sm:$0xf]
  %v96 = vld [vmem:[%s1 + $0x10c] sm:$0xf]
  %v97 = vld [vmem:[%s1 + $0x110] sm:$0xf]
  %v98 = vld [vmem:[%s1 + $0x114] sm:$0xf]
  %v99 = vld [vmem:[%s1 + $0x118] sm:$0xf]
  %v100 = vld [vmem:[%s1 + $0x11c] sm:$0xf]
  %v101 = vld [vmem:[%s1 + $0x120] sm:$0xf]
  %v102 = vld [vmem:[%s1 + $0x124] sm:$0xf]
  %v103 = vld [vmem:[%s1 + $0x128] sm:$0xf]
  %v104 = vld [vmem:[%s1 + $0x12c] sm:$0xf]
  %v105 = vld [vmem:[%s1 + $0x130] sm:$0xf]
  %v106 = vld [vmem:[%s1 + $0x134] sm:$0xf]
  %v107 = vld [vmem:[%s1 + $0x138] sm:$0xf]
  %v108 = vld [vmem:[%s1 + $0x13c] sm:$0xf]
  %v109 = vld [vmem:[%s1 + $0x140] sm:$0xf]
  %v110 = vld [vmem:[%s1 + $0x144] sm:$0xf]
  %v111 = vld [vmem:[%s1 + $0x148] sm:$0xf]
  %v112 = vld [vmem:[%s1 + $0x14c] sm:$0xf]
  %v113 = vld [vmem:[%s1 + $0x150] sm:$0xf]
  %v114 = vld [vmem:[%s1 + $0x154] sm:$0xf]
  %v115 = vld [vmem:[%s1 + $0x158] sm:$0xf]
  %v116 = vld [vmem:[%s1 + $0x15c] sm:$0xf]
  %v117 = vld [vmem:[%s1 + $0x160] sm:$0xf]
  %v118 = vld [vmem:[%s1 + $0x164] sm:$0xf]
  %v119 = vld [vmem:[%s1 + $0x168] sm:$0xf]
  %v120 = vld [vmem:[%s1 + $0x16c] sm:$0xf]
  %v121 = vld [vmem:[%s1 + $0x170] sm:$0xf]
  %v122 = vld [vmem:[%s1 + $0x174] sm:$0xf]
  %v123 = vld [vmem:[%s1 + $0x178] sm:$0xf]
  %v124 = vld [vmem:[%s1 + $0x17c] sm:$0xf]
  %v125 = vld [vmem:[%s1 + $0x180] sm:$0xf]
  %v126 = vld [vmem:[%s1 + $0x184] sm:$0xf]
  %v127 = vld [vmem:[%s2] sm:$0x1]
  %v129 = vlaneseq
  %v130 = vshrl.u32 %v129, 7
  %v131 = vsub.s32 0, %v130
  %v132 = vrot.slane %v127, %v131
  %v142 = vunpack.c.l.b16 %v21
  %v143 = vunpack.c.h.b16 %v21
  %v144 = vunpack.c.l.b16 %v22
  %v145 = vunpack.c.h.b16 %v22
  %v146 = vunpack.c.l.b16 %v23
  %v147 = vunpack.c.h.b16 %v23
  %v148 = vunpack.c.l.b16 %v24
  %v149 = vunpack.c.l.b16 %v25
  %v150 = vunpack.c.h.b16 %v25
  %v151 = vunpack.c.l.b16 %v26
  %v152 = vunpack.c.h.b16 %v26
  %v153 = vunpack.c.l.b16 %v27
  %v154 = vunpack.c.h.b16 %v27
  %v155 = vunpack.c.l.b16 %v28
  %v156 = vpack.c.b16 %v149, %v142
  %v157 = vpack.c.b16 %v150, %v143
  %v158 = vpack.c.b16 %v151, %v144
  %v159 = vpack.c.b16 %v152, %v145
  %v160 = vpack.c.b16 %v153, %v146
  %v161 = vpack.c.b16 %v154, %v147
  %v162 = vpack.c.b16 %v155, %v148
  %v267 = vunpack.c.l.b16 %v29
  %v268 = vunpack.c.l.b16 %v30
  %v269 = vunpack.c.l.b16 %v31
  %v270 = vunpack.c.l.b16 %v32
  %v271 = vunpack.c.l.b16 %v33
  %v272 = vunpack.c.l.b16 %v34
  %v273 = vunpack.c.l.b16 %v35
  %v274 = vunpack.c.l.b16 %v36
  %v275 = vunpack.c.l.b16 %v37
  %v276 = vunpack.c.l.b16 %v38
  %v277 = vunpack.c.l.b16 %v39
  %v278 = vunpack.c.l.b16 %v40
  %v279 = vunpack.c.l.b16 %v41
  %v280 = vunpack.c.l.b16 %v42
  %v281 = vunpack.c.l.b16 %v43
  %v282 = vunpack.c.l.b16 %v44
  %v283 = vunpack.c.l.b16 %v45
  %v284 = vunpack.c.l.b16 %v46
  %v285 = vunpack.c.l.b16 %v47
  %v286 = vunpack.c.l.b16 %v48
  %v287 = vunpack.c.l.b16 %v49
  %v288 = vunpack.c.l.b16 %v50
  %v289 = vunpack.c.l.b16 %v51
  %v290 = vunpack.c.l.b16 %v52
  %v291 = vunpack.c.l.b16 %v53
  %v292 = vunpack.c.l.b16 %v54
  %v293 = vunpack.c.l.b16 %v55
  %v294 = vunpack.c.l.b16 %v56
  %v295 = vunpack.c.l.b16 %v57
  %v296 = vunpack.c.l.b16 %v58
  %v297 = vunpack.c.l.b16 %v59
  %v298 = vunpack.c.l.b16 %v60
  %v299 = vunpack.c.l.b16 %v61
  %v300 = vunpack.c.l.b16 %v62
  %v301 = vunpack.c.l.b16 %v63
  %v302 = vunpack.c.l.b16 %v64
  %v303 = vunpack.c.l.b16 %v65
  %v304 = vunpack.c.l.b16 %v66
  %v305 = vunpack.c.l.b16 %v67
  %v306 = vunpack.c.l.b16 %v68
  %v307 = vunpack.c.l.b16 %v69
  %v308 = vunpack.c.l.b16 %v70
  %v309 = vunpack.c.l.b16 %v71
  %v310 = vunpack.c.l.b16 %v72
  %v311 = vunpack.c.l.b16 %v73
  %v312 = vunpack.c.l.b16 %v74
  %v313 = vunpack.c.l.b16 %v75
  %v314 = vunpack.c.l.b16 %v76
  %v315 = vunpack.c.l.b16 %v77
  %v316 = vunpack.c.l.b16 %v78
  %v317 = vunpack.c.l.b16 %v79
  %v318 = vunpack.c.l.b16 %v80
  %v319 = vunpack.c.l.b16 %v81
  %v320 = vunpack.c.l.b16 %v82
  %v321 = vunpack.c.l.b16 %v83
  %v322 = vunpack.c.l.b16 %v84
  %v323 = vunpack.c.l.b16 %v85
  %v324 = vunpack.c.l.b16 %v86
  %v325 = vunpack.c.l.b16 %v87
  %v326 = vunpack.c.l.b16 %v88
  %v327 = vunpack.c.l.b16 %v89
  %v328 = vunpack.c.l.b16 %v90
  %v329 = vunpack.c.l.b16 %v91
  %v330 = vunpack.c.l.b16 %v92
  %v331 = vunpack.c.l.b16 %v93
  %v332 = vunpack.c.l.b16 %v94
  %v333 = vunpack.c.l.b16 %v95
  %v334 = vunpack.c.l.b16 %v96
  %v335 = vunpack.c.l.b16 %v97
  %v336 = vunpack.c.l.b16 %v98
  %v337 = vunpack.c.l.b16 %v99
  %v338 = vunpack.c.l.b16 %v100
  %v339 = vunpack.c.l.b16 %v101
  %v340 = vunpack.c.l.b16 %v102
  %v341 = vunpack.c.l.b16 %v103
  %v342 = vunpack.c.l.b16 %v104
  %v343 = vunpack.c.l.b16 %v105
  %v344 = vunpack.c.l.b16 %v106
  %v345 = vunpack.c.l.b16 %v107
  %v346 = vunpack.c.l.b16 %v108
  %v347 = vunpack.c.l.b16 %v109
  %v348 = vunpack.c.l.b16 %v110
  %v349 = vunpack.c.l.b16 %v111
  %v350 = vunpack.c.l.b16 %v112
  %v351 = vunpack.c.l.b16 %v113
  %v352 = vunpack.c.l.b16 %v114
  %v353 = vunpack.c.l.b16 %v115
  %v354 = vunpack.c.l.b16 %v116
  %v355 = vunpack.c.l.b16 %v117
  %v356 = vunpack.c.l.b16 %v118
  %v357 = vunpack.c.l.b16 %v119
  %v358 = vunpack.c.l.b16 %v120
  %v359 = vunpack.c.l.b16 %v121
  %v360 = vunpack.c.l.b16 %v122
  %v361 = vunpack.c.l.b16 %v123
  %v362 = vunpack.c.l.b16 %v124
  %v363 = vunpack.c.l.b16 %v125
  %v364 = vunpack.c.l.b16 %v126
  %v365 = vpack.c.b16 %v268, %v267
  %v366 = vpack.c.b16 %v270, %v269
  %v367 = vpack.c.b16 %v272, %v271
  %v368 = vpack.c.b16 %v274, %v273
  %v369 = vpack.c.b16 %v276, %v275
  %v370 = vpack.c.b16 %v278, %v277
  %v371 = vpack.c.b16 %v280, %v279
  %v372 = vpack.c.b16 %v282, %v281
  %v373 = vpack.c.b16 %v284, %v283
  %v374 = vpack.c.b16 %v286, %v285
  %v375 = vpack.c.b16 %v288, %v287
  %v376 = vpack.c.b16 %v290, %v289
  %v377 = vpack.c.b16 %v292, %v291
  %v378 = vpack.c.b16 %v294, %v293
  %v379 = vpack.c.b16 %v296, %v295
  %v380 = vpack.c.b16 %v298, %v297
  %v381 = vpack.c.b16 %v300, %v299
  %v382 = vpack.c.b16 %v302, %v301
  %v383 = vpack.c.b16 %v304, %v303
  %v384 = vpack.c.b16 %v306, %v305
  %v385 = vpack.c.b16 %v308, %v307
  %v386 = vpack.c.b16 %v310, %v309
  %v387 = vpack.c.b16 %v312, %v311
  %v388 = vpack.c.b16 %v314, %v313
  %v389 = vpack.c.b16 %v316, %v315
  %v390 = vpack.c.b16 %v318, %v317
  %v391 = vpack.c.b16 %v320, %v319
  %v392 = vpack.c.b16 %v322, %v321
  %v393 = vpack.c.b16 %v324, %v323
  %v394 = vpack.c.b16 %v326, %v325
  %v395 = vpack.c.b16 %v328, %v327
  %v396 = vpack.c.b16 %v330, %v329
  %v397 = vpack.c.b16 %v332, %v331
  %v398 = vpack.c.b16 %v334, %v333
  %v399 = vpack.c.b16 %v336, %v335
  %v400 = vpack.c.b16 %v338, %v337
  %v401 = vpack.c.b16 %v340, %v339
  %v402 = vpack.c.b16 %v342, %v341
  %v403 = vpack.c.b16 %v344, %v343
  %v404 = vpack.c.b16 %v346, %v345
  %v405 = vpack.c.b16 %v348, %v347
  %v406 = vpack.c.b16 %v350, %v349
  %v407 = vpack.c.b16 %v352, %v351
  %v408 = vpack.c.b16 %v354, %v353
  %v409 = vpack.c.b16 %v356, %v355
  %v410 = vpack.c.b16 %v358, %v357
  %v411 = vpack.c.b16 %v360, %v359
  %v412 = vpack.c.b16 %v362, %v361
  %v413 = vpack.c.b16 %v364, %v363
  %vm463 = vcmask 130048
  %v465 = vsel %vm463, %v162, 0
  %467 = vmatprep.subr.bf16.mxu0 0
  %468 = vmatpush1.bf16.msra.mxu0 %v365
  %469 = vmatprep.subr.bf16.mxu0 0
  %470 = vmatpush1.bf16.msra.mxu0 %v366
  %471 = vmatprep.subr.bf16.mxu0 0
  %472 = vmatpush1.bf16.msra.mxu0 %v367
  %473 = vmatprep.subr.bf16.mxu0 0
  %474 = vmatpush1.bf16.msra.mxu0 %v368
  %475 = vmatprep.subr.bf16.mxu0 0
  %476 = vmatpush1.bf16.msra.mxu0 %v369
  %477 = vmatprep.subr.bf16.mxu0 0
  %478 = vmatpush1.bf16.msra.mxu0 %v370
  %479 = vmatprep.subr.bf16.mxu0 0
  %480 = vmatpush1.bf16.msra.mxu0 %v371
  %481 = vmatprep.subr.bf16.mxu0 0
  %482 = vmatpush1.bf16.msra.mxu0 %v372
  %483 = vmatprep.subr.bf16.mxu0 0
  %484 = vmatpush1.bf16.msra.mxu0 %v373
  %485 = vmatprep.subr.bf16.mxu0 0
  %486 = vmatpush1.bf16.msra.mxu0 %v374
  %487 = vmatprep.subr.bf16.mxu0 0
  %488 = vmatpush1.bf16.msra.mxu0 %v375
  %489 = vmatprep.subr.bf16.mxu0 0
  %490 = vmatpush1.bf16.msra.mxu0 %v376
  %491 = vmatprep.subr.bf16.mxu0 0
  %492 = vmatpush1.bf16.msra.mxu0 %v377
  %493 = vmatprep.subr.bf16.mxu0 0
  %494 = vmatpush1.bf16.msra.mxu0 %v378
  %495 = vmatprep.subr.bf16.mxu0 0
  %496 = vmatpush1.bf16.msra.mxu0 %v379
  %497 = vmatprep.subr.bf16.mxu0 0
  %498 = vmatpush1.bf16.msra.mxu0 %v380
  %499 = vmatprep.mubr.bf16.mxu0 %v157
  %500 = vmatmul.mubr.bf16.gmra.mrb[0].mxu0 %v156
  %v501 = vpop.f32.mrb[0].mxu0
  %v502 = vadd.f32 %v132, %v501
  %v503 = vpop.f32.mrb[0].mxu0
  %v504 = vpop.f32.mrb[0].mxu0
  %v505 = vadd.f32 %v132, %v504
  %v506 = vpop.f32.mrb[0].mxu0
  %507 = vdwg.mxu0
  %508 = vmatprep.subr.bf16.mxu0 0
  %509 = vmatpush1.bf16.msra.mxu0 %v381
  %510 = vmatprep.subr.bf16.mxu0 0
  %511 = vmatpush1.bf16.msra.mxu0 %v382
  %512 = vmatprep.subr.bf16.mxu0 0
  %513 = vmatpush1.bf16.msra.mxu0 %v383
  %514 = vmatprep.subr.bf16.mxu0 0
  %515 = vmatpush1.bf16.msra.mxu0 %v384
  %516 = vmatprep.subr.bf16.mxu0 0
  %517 = vmatpush1.bf16.msra.mxu0 %v385
  %518 = vmatprep.subr.bf16.mxu0 0
  %519 = vmatpush1.bf16.msra.mxu0 %v386
  %520 = vmatprep.subr.bf16.mxu0 0
  %521 = vmatpush1.bf16.msra.mxu0 %v387
  %522 = vmatprep.subr.bf16.mxu0 0
  %523 = vmatpush1.bf16.msra.mxu0 %v388
  %524 = vmatprep.subr.bf16.mxu0 0
  %525 = vmatpush1.bf16.msra.mxu0 %v389
  %526 = vmatprep.subr.bf16.mxu0 0
  %527 = vmatpush1.bf16.msra.mxu0 %v390
  %528 = vmatprep.subr.bf16.mxu0 0
  %529 = vmatpush1.bf16.msra.mxu0 %v391
  %530 = vmatprep.subr.bf16.mxu0 0
  %531 = vmatpush1.bf16.msra.mxu0 %v392
  %532 = vmatprep.subr.bf16.mxu0 0
  %533 = vmatpush1.bf16.msra.mxu0 %v393
  %534 = vmatprep.subr.bf16.mxu0 0
  %535 = vmatpush1.bf16.msra.mxu0 %v394
  %536 = vmatprep.subr.bf16.mxu0 0
  %537 = vmatpush1.bf16.msra.mxu0 %v395
  %538 = vmatprep.subr.bf16.mxu0 0
  %539 = vmatpush1.bf16.msra.mxu0 %v396
  %540 = vmatprep.mubr.bf16.mxu0 %v159
  %541 = vmatmul.mubr.bf16.gmra.mrb[0].mxu0 %v158
  %v542 = vpop.f32.mrb[0].mxu0
  %v543 = vadd.f32 %v502, %v542
  %v544 = vpop.f32.mrb[0].mxu0
  %v545 = vpop.f32.mrb[0].mxu0
  %v546 = vadd.f32 %v505, %v545
  %v547 = vpop.f32.mrb[0].mxu0
  %548 = vdwg.mxu0
  %549 = vmatprep.subr.bf16.mxu0 0
  %550 = vmatpush1.bf16.msra.mxu0 %v397
  %551 = vmatprep.subr.bf16.mxu0 0
  %552 = vmatpush1.bf16.msra.mxu0 %v398
  %553 = vmatprep.subr.bf16.mxu0 0
  %554 = vmatpush1.bf16.msra.mxu0 %v399
  %555 = vmatprep.subr.bf16.mxu0 0
  %556 = vmatpush1.bf16.msra.mxu0 %v400
  %557 = vmatprep.subr.bf16.mxu0 0
  %558 = vmatpush1.bf16.msra.mxu0 %v401
  %559 = vmatprep.subr.bf16.mxu0 0
  %560 = vmatpush1.bf16.msra.mxu0 %v402
  %561 = vmatprep.subr.bf16.mxu0 0
  %562 = vmatpush1.bf16.msra.mxu0 %v403
  %563 = vmatprep.subr.bf16.mxu0 0
  %564 = vmatpush1.bf16.msra.mxu0 %v404
  %565 = vmatprep.subr.bf16.mxu0 0
  %566 = vmatpush1.bf16.msra.mxu0 %v405
  %567 = vmatprep.subr.bf16.mxu0 0
  %568 = vmatpush1.bf16.msra.mxu0 %v406
  %569 = vmatprep.subr.bf16.mxu0 0
  %570 = vmatpush1.bf16.msra.mxu0 %v407
  %571 = vmatprep.subr.bf16.mxu0 0
  %572 = vmatpush1.bf16.msra.mxu0 %v408
  %573 = vmatprep.subr.bf16.mxu0 0
  %574 = vmatpush1.bf16.msra.mxu0 %v409
  %575 = vmatprep.subr.bf16.mxu0 0
  %576 = vmatpush1.bf16.msra.mxu0 %v410
  %577 = vmatprep.subr.bf16.mxu0 0
  %578 = vmatpush1.bf16.msra.mxu0 %v411
  %579 = vmatprep.subr.bf16.mxu0 0
  %580 = vmatpush1.bf16.msra.mxu0 %v412
  %581 = vmatprep.mubr.bf16.mxu0 %v161
  %582 = vmatmul.mubr.bf16.gmra.mrb[0].mxu0 %v160
  %v583 = vpop.f32.mrb[0].mxu0
  %v584 = vadd.f32 %v543, %v583
  %v585 = vpop.f32.mrb[0].mxu0
  %v586 = vpop.f32.mrb[0].mxu0
  %v587 = vadd.f32 %v546, %v586
  %v588 = vpop.f32.mrb[0].mxu0
  %589 = vdwg.mxu0
  %590 = vmatprep.subr.bf16.mxu0 0
  %591 = vmatpush1.bf16.msra.mxu0 %v413
  %592 = vmatprep.subr.bf16.mxu0 0
  %593 = vmatpush1.bf16.msra.mxu0 0
  %594 = vmatprep.subr.bf16.mxu0 0
  %595 = vmatpush1.bf16.msra.mxu0 0
  %596 = vmatprep.subr.bf16.mxu0 0
  %597 = vmatpush1.bf16.msra.mxu0 0
  %598 = vmatprep.subr.bf16.mxu0 0
  %599 = vmatpush1.bf16.msra.mxu0 0
  %600 = vmatprep.subr.bf16.mxu0 0
  %601 = vmatpush1.bf16.msra.mxu0 0
  %602 = vmatprep.subr.bf16.mxu0 0
  %603 = vmatpush1.bf16.msra.mxu0 0
  %604 = vmatprep.subr.bf16.mxu0 0
  %605 = vmatpush1.bf16.msra.mxu0 0
  %606 = vmatprep.subr.bf16.mxu0 0
  %607 = vmatpush1.bf16.msra.mxu0 0
  %608 = vmatprep.subr.bf16.mxu0 0
  %609 = vmatpush1.bf16.msra.mxu0 0
  %610 = vmatprep.subr.bf16.mxu0 0
  %611 = vmatpush1.bf16.msra.mxu0 0
  %612 = vmatprep.subr.bf16.mxu0 0
  %613 = vmatpush1.bf16.msra.mxu0 0
  %614 = vmatprep.subr.bf16.mxu0 0
  %615 = vmatpush1.bf16.msra.mxu0 0
  %616 = vmatprep.subr.bf16.mxu0 0
  %617 = vmatpush1.bf16.msra.mxu0 0
  %618 = vmatprep.subr.bf16.mxu0 0
  %619 = vmatpush1.bf16.msra.mxu0 0
  %620 = vmatprep.subr.bf16.mxu0 0
  %621 = vmatpush1.bf16.msra.mxu0 0
  %622 = vmatprep.mubr.bf16.mxu0 0
  %623 = vmatmul.mubr.bf16.gmra.mrb[0].mxu0 %v465
  %v624 = vpop.f32.mrb[0].mxu0
  %v625 = vadd.f32 %v584, %v624
  %v626 = vpop.f32.mrb[0].mxu0
  %v627 = vpop.f32.mrb[0].mxu0
  %v628 = vadd.f32 %v587, %v627
  %v629 = vpop.f32.mrb[0].mxu0
  %630 = vdwg.mxu0
  %v631 = vmax.f32 %v625, 0.0
  %v632 = vmax.f32 %v628, 0.0
  %v633 = vld [vmem:[%s3] sm:$0xff]
  %v634 = vld [vmem:[%s3 + $0x8] sm:$0xff]
  %v635 = vld [vmem:[%s3 + $0x10] sm:$0xff]
  %v636 = vld [vmem:[%s3 + $0x18] sm:$0xff]
  %v637 = vld [vmem:[%s3 + $0x20] sm:$0xff]
  %v638 = vld [vmem:[%s3 + $0x28] sm:$0xff]
  %v639 = vld [vmem:[%s3 + $0x30] sm:$0xff]
  %v640 = vld [vmem:[%s3 + $0x38] sm:$0xff]
  %v641 = vld [vmem:[%s3 + $0x40] sm:$0xff]
  %v642 = vld [vmem:[%s3 + $0x48] sm:$0xff]
  %v643 = vld [vmem:[%s3 + $0x50] sm:$0xff]
  %v644 = vld [vmem:[%s3 + $0x58] sm:$0xff]
  %v645 = vld [vmem:[%s3 + $0x60] sm:$0xff]
  %v646 = vld [vmem:[%s3 + $0x68] sm:$0xff]
  %v647 = vld [vmem:[%s3 + $0x70] sm:$0xff]
  %v648 = vld [vmem:[%s3 + $0x78] sm:$0xff]
  %v649 = vld [vmem:[%s4] sm:$0x1]
  %v651 = vlaneseq
  %v652 = vshrl.u32 %v651, 7
  %v653 = vsub.s32 0, %v652
  %v654 = vrot.slane %v649, %v653
  %656 = vmatprep.subr.mxu0 0.0
  %657 = vmatpush1.msra.mxu0 %v633
  %658 = vmatprep.subr.mxu0 0.0
  %659 = vmatpush1.msra.mxu0 %v634
  %660 = vmatprep.subr.mxu0 0.0
  %661 = vmatpush1.msra.mxu0 %v635
  %662 = vmatprep.subr.mxu0 0.0
  %663 = vmatpush1.msra.mxu0 %v636
  %664 = vmatprep.subr.mxu0 0.0
  %665 = vmatpush1.msra.mxu0 %v637
  %666 = vmatprep.subr.mxu0 0.0
  %667 = vmatpush1.msra.mxu0 %v638
  %668 = vmatprep.subr.mxu0 0.0
  %669 = vmatpush1.msra.mxu0 %v639
  %670 = vmatprep.subr.mxu0 0.0
  %671 = vmatpush1.msra.mxu0 %v640
  %672 = vmatprep.subr.mxu0 0.0
  %673 = vmatpush1.msra.mxu0 %v641
  %674 = vmatprep.subr.mxu0 0.0
  %675 = vmatpush1.msra.mxu0 %v642
  %676 = vmatprep.subr.mxu0 0.0
  %677 = vmatpush1.msra.mxu0 %v643
  %678 = vmatprep.subr.mxu0 0.0
  %679 = vmatpush1.msra.mxu0 %v644
  %680 = vmatprep.subr.mxu0 0.0
  %681 = vmatpush1.msra.mxu0 %v645
  %682 = vmatprep.subr.mxu0 0.0
  %683 = vmatpush1.msra.mxu0 %v646
  %684 = vmatprep.subr.mxu0 0.0
  %685 = vmatpush1.msra.mxu0 %v647
  %686 = vmatprep.subr.mxu0 0.0
  %687 = vmatpush1.msra.mxu0 %v648
  %688 = vmatprep.subr.mxu0 0.0
  %689 = vmatpush1.msra.mxu0 0.0
  %690 = vmatprep.subr.mxu0 0.0
  %691 = vmatpush1.msra.mxu0 0.0
  %692 = vmatprep.subr.mxu0 0.0
  %693 = vmatpush1.msra.mxu0 0.0
  %694 = vmatprep.subr.mxu0 0.0
  %695 = vmatpush1.msra.mxu0 0.0
  %696 = vmatprep.subr.mxu0 0.0
  %697 = vmatpush1.msra.mxu0 0.0
  %698 = vmatprep.subr.mxu0 0.0
  %699 = vmatpush1.msra.mxu0 0.0
  %700 = vmatprep.subr.mxu0 0.0
  %701 = vmatpush1.msra.mxu0 0.0
  %702 = vmatprep.subr.mxu0 0.0
  %703 = vmatpush1.msra.mxu0 0.0
  %704 = vmatprep.subr.mxu0 0.0
  %705 = vmatpush1.msra.mxu0 0.0
  %706 = vmatprep.subr.mxu0 0.0
  %707 = vmatpush1.msra.mxu0 0.0
  %708 = vmatprep.subr.mxu0 0.0
  %709 = vmatpush1.msra.mxu0 0.0
  %710 = vmatprep.subr.mxu0 0.0
  %711 = vmatpush1.msra.mxu0 0.0
  %712 = vmatprep.subr.mxu0 0.0
  %713 = vmatpush1.msra.mxu0 0.0
  %714 = vmatprep.subr.mxu0 0.0
  %715 = vmatpush1.msra.mxu0 0.0
  %716 = vmatprep.subr.mxu0 0.0
  %717 = vmatpush1.msra.mxu0 0.0
  %718 = vmatprep.subr.mxu0 0.0
  %719 = vmatpush1.msra.mxu0 0.0
  %720 = vmatprep.mubr.f32.mxu0 0.0
  %721 = vmatmul.mubr.f32.gmra.mrb[0].mxu0 %v631
  %v722 = vpop.f32.mrb[0].mxu0
  %v723 = vadd.f32 %v654, %v722
  %v724 = vpop.f32.mrb[0].mxu0
  %725 = vmatprep.mubr.f32.mxu0 0.0
  %726 = vmatmul.mubr.f32.gmra.mrb[0].mxu0 %v632
  %v727 = vpop.f32.mrb[0].mxu0
  %v728 = vadd.f32 %v654, %v727
  %v729 = vpop.f32.mrb[0].mxu0
  %730 = vdwg.mxu0
  %731 = vmax.xlane.f32.xlu0 %v723
  %v732 = vpop.xlane.xlu0 %731
  %733 = vmax.xlane.f32.xlu0 %v728
  %v734 = vpop.xlane.xlu0 %733
  %v735 = vsub.f32 %v723, %v732
  %v736 = vsub.f32 %v728, %v734
  %v737 = vmul.f32 %v735, 1.442695
  %v738 = vpow.pop %v737
  %v739 = vmul.f32 %v736, 1.442695
  %v740 = vpow.pop %v739
  %741 = vadd.xlane.f32.xlu0 %v738
  %v742 = vpop.xlane.xlu0 %741
  %743 = vadd.xlane.f32.xlu0 %v740
  %v744 = vpop.xlane.xlu0 %743
  %v745 = vlog2.pop %v742
  %v746 = vmul.f32 %v745, 0.6931472
  %v747 = vlog2.pop %v744
  %v748 = vmul.f32 %v747, 0.6931472
  %v749 = vsub.f32 %v735, %v746
  %v750 = vsub.f32 %v736, %v748
  %751 = vst [vmem:[%s5] sm:$0xff] %v749
  %752 = vst [vmem:[%s5 + $0x8] sm:$0xff] %v750
  // Predicated region
  $region22: #{mnist_net_forward.1} parent=0 // pred_check
    _
  $region23: #{mnist_net_forward.1} parent=0 // pred_check_branch
    %754 = sbr.rel (0) target = $region25
  $region24: #{mnist_net_forward.1} parent=0 // pred_region
    _
  $region25: #{mnist_net_forward.1} parent=0 // pred_fallthru
    _
  // Predicated region
  $region26: #{mnist_net_forward.1} parent=0 // pred_check
    _
  $region27: #{mnist_net_forward.1} parent=0 // pred_check_branch
    %756 = sbr.rel (0) target = $region29
  $region28: #{mnist_net_forward.1} parent=0 // pred_region
    _
  $region29: #{mnist_net_forward.1} parent=0 // pred_fallthru
    _

</llo_original>
